<compile_context>
chip_gen: v7x
topology: tpu7x:2x2x1
jax: 0.10.0
libtpu: 0.0.40
codegen_flags: <defaults>
</compile_context>

<pallas_src>
import math
from typing import Sequence

import jax
import jax.numpy as jnp
import numpy as np
from jax.experimental import pallas as pl
from jax.experimental.pallas import tpu as pltpu


def _split_dropout_kernel(seed_ref, x_ref, thresh_ref, scale_ref, o_ref):
    tr, c = x_ref.shape

    # Absolute flat element index (invariant to tiling / lane folding, since the
    # fold is a contiguous reshape).
    row0 = (pl.program_id(0) * tr).astype(jnp.uint32)
    rows = jax.lax.broadcasted_iota(jnp.uint32, (tr, c), 0)
    cols = jax.lax.broadcasted_iota(jnp.uint32, (tr, c), 1)
    idx = (row0 + rows) * jnp.uint32(c) + cols

    # Stateless hash: mix seed into the index, then murmur3 fmix32 finalizer.
    seed = seed_ref[0].astype(jnp.uint32) * jnp.uint32(0x9E3779B1)
    h = idx ^ seed
    h = h * jnp.uint32(0xCC9E2D51)
    h = h ^ (h >> 16)
    h = h * jnp.uint32(0x85EBCA6B)
    h = h ^ (h >> 13)
    h = h * jnp.uint32(0xC2B2AE35)
    h = h ^ (h >> 16)

    # Integer-threshold dropout: drop with probability thresh / 2^32.
    keep = h >= thresh_ref[...]            # (1, C) broadcasts over rows
    x = x_ref[...]                          # compute in the input dtype (bf16 ok)
    o_ref[...] = jnp.where(keep, x * scale_ref[...], jnp.zeros_like(x)).astype(
        o_ref.dtype
    )


def split_dropout(
    xs: jax.Array,
    chunk_sizes: Sequence[int],
    dropout_rates: Sequence[float],
    *,
    seed: int = 0,
    training: bool = True,
) -> jax.Array:
    assert len(chunk_sizes) == len(dropout_rates)
    if not training:
        return xs

    orig_shape = xs.shape
    D = orig_shape[-1]
    assert sum(chunk_sizes) == D, "chunk_sizes must sum to the last dim"
    x2d = xs.reshape(-1, D)
    N = x2d.shape[0]

    # Per-column uint32 drop thresholds and keep scales (host-side glue).
    rates = np.zeros((D,), dtype=np.float64)
    off = 0
    for sz, p in zip(chunk_sizes, dropout_rates):
        rates[off:off + sz] = float(p)
        off += sz
    thresh = np.minimum(np.round(rates * (2.0 ** 32)), 2.0 ** 32 - 1).astype(np.uint32)
    scales = np.where(rates < 1.0, 1.0 / np.maximum(1.0 - rates, 1e-38), 0.0).astype(
        np.float32
    )

    # Lane-dense fold: (N, D) -> (N/k, k*D) with k*D a multiple of 128 when possible.
    k = 1
    if D % 128 != 0:
        kk = math.lcm(D, 128) // D
        if N % kk == 0:
            k = kk
    C = k * D
    n_rows = N // k
    x2d = x2d.reshape(n_rows, C)
    thresh2d = np.tile(thresh, k)[None, :]
    scales2d = np.tile(scales, k)[None, :]

    # Row-tile sized for ~3 MiB blocks (fits double-buffered in+out in default
    # scoped VMEM on v5e/v6e/v7x).  TODO(synk): add a column grid axis for
    # extremely wide C where even 8 rows exceed the VMEM budget.
    itemsize = np.dtype(xs.dtype).itemsize
    row_bytes = C * itemsize
    target_bytes = 3 * 1024 * 1024
    if n_rows * row_bytes <= target_bytes:
        tr = n_rows
        pad = 0
    else:
        tr = max(8, int(target_bytes // row_bytes) // 8 * 8)
        pad = (-n_rows) % tr
    if pad:
        x2d = jnp.pad(x2d, ((0, pad), (0, 0)))
    n_rows_padded = n_rows + pad

    seed_arr = jnp.asarray([seed], dtype=jnp.int32)
    thresh_j = jnp.asarray(thresh2d)                       # uint32
    scales_j = jnp.asarray(scales2d).astype(xs.dtype)      # native-dtype scales

    grid = (n_rows_padded // tr,)
    out2d = pl.pallas_call(
        _split_dropout_kernel,
        out_shape=jax.ShapeDtypeStruct((n_rows_padded, C), xs.dtype),
        grid_spec=pltpu.PrefetchScalarGridSpec(
            num_scalar_prefetch=1,
            grid=grid,
            in_specs=[
                pl.BlockSpec((tr, C), lambda i, seed: (i, 0)),
                pl.BlockSpec((1, C), lambda i, seed: (0, 0)),
                pl.BlockSpec((1, C), lambda i, seed: (0, 0)),
            ],
            out_specs=pl.BlockSpec((tr, C), lambda i, seed: (i, 0)),
        ),
        compiler_params=pltpu.CompilerParams(
            # Mask derives from absolute element index -> grid steps independent.
            dimension_semantics=("parallel",),
        ),
    )(seed_arr, x2d, thresh_j, scales_j)

    if pad:
        out2d = out2d[:n_rows]
    return out2d.reshape(orig_shape)


if __name__ == "__main__":
    key = jax.random.PRNGKey(0)
    chunk_sizes = [8, 16, 8]            # D = 32
    dropout_rates = [0.1, 0.5, 0.0]

    x = jax.random.normal(key, (2, 8, 32), dtype=jnp.float32)

    out = split_dropout(x, chunk_sizes, dropout_rates, seed=1234, training=True)
    out = jax.block_until_ready(out)

    # Semantics checks (not bit-exact RNG equivalence with torch).
    assert out.shape == x.shape and out.dtype == x.dtype

    # Chunk with rate 0.0 passes through unchanged.
    np.testing.assert_allclose(np.asarray(out[..., 24:]), np.asarray(x[..., 24:]),
                               rtol=1e-6)

    # Kept elements in the rate-0.5 chunk are scaled exactly by 1/(1-p) = 2.
    chunk1 = np.asarray(out[..., 8:24])
    ref1 = np.asarray(x[..., 8:24]) * 2.0
    kept = chunk1 != 0.0
    np.testing.assert_allclose(chunk1[kept], ref1[kept], rtol=1e-5)

    # Drop fraction in the rate-0.5 chunk is roughly 0.5 (loose bound).
    frac_kept = kept.mean()
    assert 0.2 < frac_kept < 0.8, f"unexpected keep fraction {frac_kept}"

    # Eval mode is the identity.
    out_eval = split_dropout(x, chunk_sizes, dropout_rates, training=False)
    np.testing.assert_allclose(np.asarray(out_eval), np.asarray(x))

    print("KERNEL_OK")
</pallas_src>

<mosaic_0001>
module attributes {stable_mosaic.version = 11 : i64} {
  func.func @_split_dropout_kernel(%arg0: i32, %arg1: memref<1xi32, #tpu.memory_space<smem>>, %arg2: memref<4x128xf32, #tpu.memory_space<vmem>>, %arg3: memref<1x128xi32, #tpu.memory_space<vmem>>, %arg4: memref<1x128xf32, #tpu.memory_space<vmem>>, %arg5: memref<4x128xf32, #tpu.memory_space<vmem>>) attributes {dimension_semantics = [#tpu.dimension_semantics<parallel>], iteration_bounds = array<i64: 1>, scalar_prefetch = 1 : i64, scratch_operands = 0 : i64, tpu.core_type = #tpu.core_type<tc>, window_params = [{transform_indices = @transform_0, window_bounds = array<i64: 4, 128>}, {pipeline_mode = #tpu.pipeline_mode<synchronous>, transform_indices = @transform_1, window_bounds = array<i64: 1, 128>}, {pipeline_mode = #tpu.pipeline_mode<synchronous>, transform_indices = @transform_2, window_bounds = array<i64: 1, 128>}, {transform_indices = @transform_3, window_bounds = array<i64: 4, 128>}]} {
    %c4_i32 = arith.constant 4 : i32
    %0 = arith.muli %arg0, %c4_i32 : i32
    %1 = tpu.iota {dimensions = array<i32: 0>} : vector<4x128xi32>
    %2 = tpu.iota {dimensions = array<i32: 1>} : vector<4x128xi32>
    %3 = vector.broadcast %0 : i32 to vector<4x128xi32>
    %4 = arith.addi %3, %1 : vector<4x128xi32>
    %c128_i32 = arith.constant 128 : i32
    %5 = vector.broadcast %c128_i32 : i32 to vector<4x128xi32>
    %6 = arith.muli %4, %5 : vector<4x128xi32>
    %7 = arith.addi %6, %2 : vector<4x128xi32>
    %c0 = arith.constant 0 : index
    %8 = memref.load %arg1[%c0] : memref<1xi32, #tpu.memory_space<smem>>
    %c-1640531535_i32 = arith.constant -1640531535 : i32
    %9 = arith.muli %8, %c-1640531535_i32 : i32
    %10 = vector.broadcast %9 : i32 to vector<4x128xi32>
    %11 = arith.xori %7, %10 : vector<4x128xi32>
    %c-862048943_i32 = arith.constant -862048943 : i32
    %12 = vector.broadcast %c-862048943_i32 : i32 to vector<4x128xi32>
    %13 = arith.muli %11, %12 : vector<4x128xi32>
    %c16_i32 = arith.constant 16 : i32
    %14 = vector.broadcast %c16_i32 : i32 to vector<4x128xi32>
    %15 = arith.shrui %13, %14 : vector<4x128xi32>
    %16 = arith.xori %13, %15 : vector<4x128xi32>
    %c-2048144789_i32 = arith.constant -2048144789 : i32
    %17 = vector.broadcast %c-2048144789_i32 : i32 to vector<4x128xi32>
    %18 = arith.muli %16, %17 : vector<4x128xi32>
    %c13_i32 = arith.constant 13 : i32
    %19 = vector.broadcast %c13_i32 : i32 to vector<4x128xi32>
    %20 = arith.shrui %18, %19 : vector<4x128xi32>
    %21 = arith.xori %18, %20 : vector<4x128xi32>
    %c-1028477387_i32 = arith.constant -1028477387 : i32
    %22 = vector.broadcast %c-1028477387_i32 : i32 to vector<4x128xi32>
    %23 = arith.muli %21, %22 : vector<4x128xi32>
    %c16_i32_0 = arith.constant 16 : i32
    %24 = vector.broadcast %c16_i32_0 : i32 to vector<4x128xi32>
    %25 = arith.shrui %23, %24 : vector<4x128xi32>
    %26 = arith.xori %23, %25 : vector<4x128xi32>
    %c0_1 = arith.constant 0 : index
    %c0_2 = arith.constant 0 : index
    %27 = vector.load %arg3[%c0_1, %c0_2] : memref<1x128xi32, #tpu.memory_space<vmem>>, vector<1x128xi32>
    %28 = vector.broadcast %27 : vector<1x128xi32> to vector<4x128xi32>
    %29 = arith.cmpi uge, %26, %28 : vector<4x128xi32>
    %c0_3 = arith.constant 0 : index
    %c0_4 = arith.constant 0 : index
    %30 = vector.load %arg2[%c0_3, %c0_4] : memref<4x128xf32, #tpu.memory_space<vmem>>, vector<4x128xf32>
    %c0_5 = arith.constant 0 : index
    %c0_6 = arith.constant 0 : index
    %31 = vector.load %arg4[%c0_5, %c0_6] : memref<1x128xf32, #tpu.memory_space<vmem>>, vector<1x128xf32>
    %32 = vector.broadcast %31 : vector<1x128xf32> to vector<4x128xf32>
    %33 = arith.mulf %30, %32 : vector<4x128xf32>
    %cst = arith.constant 0.000000e+00 : f32
    %34 = vector.broadcast %cst : f32 to vector<4x128xf32>
    %35 = arith.select %29, %33, %34 : vector<4x128xi1>, vector<4x128xf32>
    %c0_7 = arith.constant 0 : index
    %c0_8 = arith.constant 0 : index
    %36 = vector.load %arg5[%c0_7, %c0_8] : memref<4x128xf32, #tpu.memory_space<vmem>>, vector<4x128xf32>
    tpu.vector_store %arg5[%c0_7, %c0_8], %35 {strides = array<i32>} : memref<4x128xf32, #tpu.memory_space<vmem>>, vector<4x128xf32>,
    return
  }
  func.func @transform_0(%arg0: i32, %arg1: memref<1xi32, #tpu.memory_space<smem>>) -> (i32, i32) {
    %c0_i32 = arith.constant 0 : i32
    %c0_i32_0 = arith.constant 0 : i32
    return %arg0, %c0_i32 : i32, i32
  }
  func.func @transform_1(%arg0: i32, %arg1: memref<1xi32, #tpu.memory_space<smem>>) -> (i32, i32) {
    %c0_i32 = arith.constant 0 : i32
    %c0_i32_0 = arith.constant 0 : i32
    %c0_i32_1 = arith.constant 0 : i32
    return %c0_i32, %c0_i32_0 : i32, i32
  }
  func.func @transform_2(%arg0: i32, %arg1: memref<1xi32, #tpu.memory_space<smem>>) -> (i32, i32) {
    %c0_i32 = arith.constant 0 : i32
    %c0_i32_0 = arith.constant 0 : i32
    %c0_i32_1 = arith.constant 0 : i32
    return %c0_i32, %c0_i32_0 : i32, i32
  }
  func.func @transform_3(%arg0: i32, %arg1: memref<1xi32, #tpu.memory_space<smem>>) -> (i32, i32) {
    %c0_i32 = arith.constant 0 : i32
    %c0_i32_0 = arith.constant 0 : i32
    return %arg0, %c0_i32 : i32, i32
  }
}

</mosaic_0001>

<llo_original>
// kernel: tpu_custom_call.1
$region0: #{tpu_custom_call.1}
  #allocation0 [shape = 'u32[]', space=smem, size = 0x4, offset = 0x4, fixed_abs, tag = 'smem constant byte address 0x4 - core index']
  #allocation1 [shape = 'u32[144,128]{1,0:T(1,128)}', space=vmem, size = 0x12000, scoped, tag = 'internal scratch']
  #allocation2 [shape = 's32[1]{0}', space=sflag, size = 0x4, scoped, tag = 'scoped memory for tpu_custom_call.1']
  #allocation3 [shape = 's32[1]{0:T(128)S(6)}', space=smem, size = 0x200, scoped, tag = 'prefetched SMEM operand 0']
  %s0 = inlined_call_operand.<no memory space> [shape: s32[1], index: 0, kind: input, shape index: {}]
  %s1 = inlined_call_operand.hbm [shape: f32[4,128], index: 1, kind: input, shape index: {}]
  %s2 = inlined_call_operand.vmem [shape: u32[1,128], index: 2, kind: input, shape index: {}]
  %s3 = inlined_call_operand.vmem [shape: f32[1,128], index: 3, kind: input, shape index: {}]
  %s4 = inlined_call_operand.hbm [shape: f32[4,128], index: 4, kind: output, shape index: {}]
  %s5 = sld [smem:[#allocation0]]
  $region26: #{tpu_custom_call.1} parent=0
    _
  %s7 = ssub.s32 1, %s5
  %s8 = scalar_select 0, %s7, %s5
  %9 = sst [smem:[#allocation3]] %s0
  $region1: #{tpu_custom_call.1} parent=0
    #allocation4 [shape = 'u8[2048]{0}', space=vmem, size = 0x800, scoped, tag = 'input window, operand 1, single buffered']
    #allocation5 [shape = 's32[1]{0}', space=sflag, size = 0x4, scoped, tag = 'scoped memory for tpu_custom_call.1']
    #allocation6 [shape = 's32[1]{0}', space=sflag, size = 0x4, scoped, tag = 'scoped memory for tpu_custom_call.1']
    #allocation7 [shape = 'u8[2048]{0}', space=vmem, size = 0x800, scoped, tag = 'output window, operand 0, single buffered']
    %10 = vsyncpa [#allocation5], 0
    %11 = vsyncpa [#allocation6], 0
    // Predicated region
    $region2: #{tpu_custom_call.1} parent=1 // pred_check
      _
    $region3: #{tpu_custom_call.1} parent=1 // pred_check_branch
      %13 = sbr.rel (0) target = $region5
    $region4: #{tpu_custom_call.1} parent=1 // pred_region
      %s15 = ssub.s32 64, 64
      %16 = vsyncadd [#allocation5], %s15
      %s18 = sshll.u32 [#allocation4], 4
      %s19 = int_to_ptr.vmem [resolvable:$true] %s18
      %21 = dma.hbm_to_vmem [thread:$0]  %s1, 64, %s19, [#allocation5]
    $region5: #{tpu_custom_call.1} parent=1 // pred_fallthru
      _
    // Predicated region
    $region6: #{tpu_custom_call.1} parent=1 // pred_check
      _
    $region7: #{tpu_custom_call.1} parent=1 // pred_check_branch
      %23 = sbr.rel (0) target = $region9
    $region8: #{tpu_custom_call.1} parent=1 // pred_region
      _
    $region9: #{tpu_custom_call.1} parent=1 // pred_fallthru
      _
    // Predicated region
    $region10: #{tpu_custom_call.1} parent=1 // pred_check
      _
    $region11: #{tpu_custom_call.1} parent=1 // pred_check_branch
      %25 = sbr.rel (0) target = $region13
    $region12: #{tpu_custom_call.1} parent=1 // pred_region
      _
    $region13: #{tpu_custom_call.1} parent=1 // pred_fallthru
      _
    // Predicated region
    $region14: #{tpu_custom_call.1} parent=1 // pred_check
      _
    $region15: #{tpu_custom_call.1} parent=1 // pred_check_branch
      %27 = sbr.rel (0) target = $region17
    $region16: #{tpu_custom_call.1} parent=1 // pred_region
      %28 = dma.done [#allocation5], 64
    $region17: #{tpu_custom_call.1} parent=1 // pred_fallthru
      _
    %s29 = smul.u32 0, 4
    %v30 = vlaneseq
    %v31 = vshrl.u32 %v30, 7
    %v32 = vlaneseq
    %v33 = vand.u32 %v32, 127
    %v34 = vstv %s29
    %v35 = vadd.s32 %v34, %v31
    %v36 = vmul.u32 %v35, 128
    %v37 = vadd.s32 %v36, %v33
    %s38 = sld [smem:[#allocation3]]
    %s39 = smul.u32 %s38, 2654435761
    %v40 = vstv %s39
    %v41 = vxor.u32 %v37, %v40
    %v42 = vmul.u32 %v41, 3432918353
    %v43 = vshrl.u32 %v42, 16
    %v44 = vxor.u32 %v42, %v43
    %v45 = vmul.u32 %v44, 2246822507
    %v46 = vshrl.u32 %v45, 13
    %v47 = vxor.u32 %v45, %v46
    %v48 = vmul.u32 %v47, 3266489909
    %v49 = vshrl.u32 %v48, 16
    %v50 = vxor.u32 %v48, %v49
    %v51 = vld [vmem:[%s2] sm:$0x1]
    %v52 = vlaneseq
    %v53 = vshrl.u32 %v52, 7
    %v54 = vsub.s32 0, %v53
    %v55 = vrot.slane %v51, %v54
    %vm56 = vcmp.ge.u32.totalorder %v50, %v55
    %v57 = vld [vmem:[#allocation4] sm:$0xf]
    %v58 = vld [vmem:[%s3] sm:$0x1]
    %v60 = vlaneseq
    %v61 = vshrl.u32 %v60, 7
    %v62 = vsub.s32 0, %v61
    %v63 = vrot.slane %v58, %v62
    %v65 = vmul.f32 %v57, %v63
    %v66 = vsel %vm56, %v65, 0.0
    %67 = vst [vmem:[#allocation7] sm:$0xf] %v66
    // Predicated region
    $region18: #{tpu_custom_call.1} parent=1 // pred_check
      _
    $region19: #{tpu_custom_call.1} parent=1 // pred_check_branch
      %69 = sbr.rel (0) target = $region21
    $region20: #{tpu_custom_call.1} parent=1 // pred_region
      %s71 = ssub.s32 64, 64
      %72 = vsyncadd [#allocation6], %s71
      %s74 = sshll.u32 [#allocation7], 4
      %s75 = int_to_ptr.vmem [resolvable:$true] %s74
      %77 = dma.vmem_to_hbm [thread:$0]  %s75, 64, %s4, [#allocation6]
    $region21: #{tpu_custom_call.1} parent=1 // pred_fallthru
      _
    // Predicated region
    $region22: #{tpu_custom_call.1} parent=1 // pred_check
      _
    $region23: #{tpu_custom_call.1} parent=1 // pred_check_branch
      %79 = sbr.rel (0) target = $region25
    $region24: #{tpu_custom_call.1} parent=1 // pred_region
      %80 = dma.done [#allocation6], 64
    $region25: #{tpu_custom_call.1} parent=1 // pred_fallthru
      _
    %81 = vsyncpa [#allocation5], 1
    %82 = vsyncpa [#allocation6], 1

</llo_original>
